<compile_context>
chip_gen: v7x
topology: tpu7x:2x2x1
jax: 0.10.0
libtpu: 0.0.40
codegen_flags: <defaults>
</compile_context>

<pallas_src>
import jax
import jax.numpy as jnp
from jax.experimental import pallas as pl
from jax.experimental.pallas import tpu as pltpu


def _copy_kernel(x_ref, o_ref):
    # Elementwise identity: load the whole VMEM tile, store it back out.
    o_ref[...] = x_ref[...]


def bravo_encoder_forward(x: jax.Array) -> jax.Array:
    """Identity forward pass of BraVO_Encoder via a Pallas TPU copy kernel."""
    orig_shape = x.shape

    # Free (row-major) 2-D view: collapse leading dims, keep the last dim.
    if x.ndim == 0:
        x2d = x.reshape(1, 1)
    elif x.ndim == 1:
        x2d = x.reshape(1, x.shape[0])
    else:
        x2d = x.reshape(-1, x.shape[-1])
    rows, cols = x2d.shape

    # Tile rows only when a single full-array block would exceed a per-tile
    # budget that is safe across generations (v7x: 32 MiB scoped VMEM with
    # double-buffered in+out => 4 live tiles; ~4 MiB/tile leaves headroom).
    bytes_per_row = cols * x.dtype.itemsize
    max_tile_bytes = 4 * 1024 * 1024
    if rows * bytes_per_row <= max_tile_bytes:
        block_rows = rows                       # one full-extent block, grid=(1,)
    else:
        # Largest multiple of 8 sublanes whose tile fits the budget.
        block_rows = max(8, (max_tile_bytes // bytes_per_row) // 8 * 8)
    grid = (pl.cdiv(rows, block_rows),)

    out2d = pl.pallas_call(
        _copy_kernel,
        out_shape=jax.ShapeDtypeStruct((rows, cols), x.dtype),
        grid_spec=pl.GridSpec(
            grid=grid,
            # Last dim is the full array dim (exempt from the 128 rule);
            # block_rows is either the full row count or a multiple of 8.
            in_specs=[pl.BlockSpec((block_rows, cols), lambda i: (i, 0))],
            out_specs=pl.BlockSpec((block_rows, cols), lambda i: (i, 0)),
        ),
        # In-place copy: with a donated input this eliminates the second HBM
        # buffer; without donation XLA keeps the caller's x valid via a copy.
        input_output_aliases={0: 0},
        compiler_params=pltpu.CompilerParams(
            # No-op on 1-TC chips (v5e/v6e); shards the grid across both
            # TensorCores on v7x when the input is large enough to tile.
            dimension_semantics=("parallel",),
        ),
    )(x2d)

    return out2d.reshape(orig_shape)


if __name__ == "__main__":
    # Deterministic example input, NCHW like PyTorch: (batch=2, C=4, H=16, W=16).
    key = jax.random.PRNGKey(0)
    x = jax.random.normal(key, (2, 4, 16, 16), dtype=jnp.float32)

    # Path 1: non-donated call — x stays valid so we can verify the identity.
    fwd = jax.jit(bravo_encoder_forward)
    y = jax.block_until_ready(fwd(x))
    assert y.shape == x.shape and y.dtype == x.dtype
    assert bool(jnp.all(y == x))

    # Path 2: donated call — exercises true in-place aliasing (no extra HBM
    # buffer).  The donated buffer is not reused afterwards.
    fwd_donated = jax.jit(bravo_encoder_forward, donate_argnums=0)
    x_donated = jnp.array(x)  # fresh buffer to donate
    y2 = jax.block_until_ready(fwd_donated(x_donated))
    assert bool(jnp.all(y2 == x))

    print("KERNEL_OK")
</pallas_src>

<mosaic_0001>
module attributes {stable_mosaic.version = 11 : i64} {
  func.func @_copy_kernel(%arg0: i32, %arg1: memref<128x16xf32, #tpu.memory_space<vmem>>, %arg2: memref<128x16xf32, #tpu.memory_space<vmem>>) attributes {dimension_semantics = [#tpu.dimension_semantics<parallel>], iteration_bounds = array<i64: 1>, scalar_prefetch = 0 : i64, scratch_operands = 0 : i64, tpu.core_type = #tpu.core_type<tc>, window_params = [{transform_indices = @transform_0, window_bounds = array<i64: 128, 16>}, {transform_indices = @transform_1, window_bounds = array<i64: 128, 16>}]} {
    %c0 = arith.constant 0 : index
    %c0_0 = arith.constant 0 : index
    %0 = vector.load %arg1[%c0, %c0_0] : memref<128x16xf32, #tpu.memory_space<vmem>>, vector<128x16xf32>
    %c0_1 = arith.constant 0 : index
    %c0_2 = arith.constant 0 : index
    %1 = vector.load %arg2[%c0_1, %c0_2] : memref<128x16xf32, #tpu.memory_space<vmem>>, vector<128x16xf32>
    tpu.vector_store %arg2[%c0_1, %c0_2], %0 {strides = array<i32>} : memref<128x16xf32, #tpu.memory_space<vmem>>, vector<128x16xf32>,
    return
  }
  func.func @transform_0(%arg0: i32) -> (i32, i32) {
    %c0_i32 = arith.constant 0 : i32
    %c0_i32_0 = arith.constant 0 : i32
    return %arg0, %c0_i32 : i32, i32
  }
  func.func @transform_1(%arg0: i32) -> (i32, i32) {
    %c0_i32 = arith.constant 0 : i32
    %c0_i32_0 = arith.constant 0 : i32
    return %arg0, %c0_i32 : i32, i32
  }
}

</mosaic_0001>

<llo_original>
// kernel: bravo_encoder_forward.1
$region0: #{bravo_encoder_forward.1}
  #allocation0 [shape = 'u32[]', space=smem, size = 0x4, offset = 0x4, fixed_abs, tag = 'smem constant byte address 0x4 - core index']
  #allocation1 [shape = 'u32[144,128]{1,0:T(1,128)}', space=vmem, size = 0x12000, scoped, tag = 'internal scratch']
  %s0 = inlined_call_operand.vmem [shape: f32[128,16], index: 0, kind: input, shape index: {}, may-alias: {0,1}]
  %s1 = inlined_call_operand.vmem [shape: f32[128,16], index: 1, kind: output, shape index: {}, may-alias: {0,1}]
  %s2 = sld [smem:[#allocation0]]
  $region14: #{bravo_encoder_forward.1} parent=0
    _
  %s4 = ssub.s32 1, %s2
  %s5 = scalar_select 0, %s4, %s2
  // Predicated region
  $region2: #{bravo_encoder_forward.1} parent=0 // pred_check
    _
  $region3: #{bravo_encoder_forward.1} parent=0 // pred_check_branch
    %7 = sbr.rel (0) target = $region5
  $region4: #{bravo_encoder_forward.1} parent=0 // pred_region
    _
  $region5: #{bravo_encoder_forward.1} parent=0 // pred_fallthru
    _
  %v8 = vld [vmem:[%s0] sm:$0xff]
  %v9 = vld [vmem:[%s0 + $0x8] sm:$0xff]
  %v10 = vld [vmem:[%s0 + $0x10] sm:$0xff]
  %v11 = vld [vmem:[%s0 + $0x18] sm:$0xff]
  %v12 = vld [vmem:[%s0 + $0x20] sm:$0xff]
  %v13 = vld [vmem:[%s0 + $0x28] sm:$0xff]
  %v14 = vld [vmem:[%s0 + $0x30] sm:$0xff]
  %v15 = vld [vmem:[%s0 + $0x38] sm:$0xff]
  %v16 = vld [vmem:[%s0 + $0x40] sm:$0xff]
  %v17 = vld [vmem:[%s0 + $0x48] sm:$0xff]
  %v18 = vld [vmem:[%s0 + $0x50] sm:$0xff]
  %v19 = vld [vmem:[%s0 + $0x58] sm:$0xff]
  %v20 = vld [vmem:[%s0 + $0x60] sm:$0xff]
  %v21 = vld [vmem:[%s0 + $0x68] sm:$0xff]
  %v22 = vld [vmem:[%s0 + $0x70] sm:$0xff]
  %v23 = vld [vmem:[%s0 + $0x78] sm:$0xff]
  %vm24 = vcmask 130048
  %25 = vst.msk [vmem:[%s1] sm:$0xff] %vm24, %v8
  %26 = vst.msk [vmem:[%s1 + $0x8] sm:$0xff] %vm24, %v9
  %27 = vst.msk [vmem:[%s1 + $0x10] sm:$0xff] %vm24, %v10
  %28 = vst.msk [vmem:[%s1 + $0x18] sm:$0xff] %vm24, %v11
  %29 = vst.msk [vmem:[%s1 + $0x20] sm:$0xff] %vm24, %v12
  %30 = vst.msk [vmem:[%s1 + $0x28] sm:$0xff] %vm24, %v13
  %31 = vst.msk [vmem:[%s1 + $0x30] sm:$0xff] %vm24, %v14
  %32 = vst.msk [vmem:[%s1 + $0x38] sm:$0xff] %vm24, %v15
  %33 = vst.msk [vmem:[%s1 + $0x40] sm:$0xff] %vm24, %v16
  %34 = vst.msk [vmem:[%s1 + $0x48] sm:$0xff] %vm24, %v17
  %35 = vst.msk [vmem:[%s1 + $0x50] sm:$0xff] %vm24, %v18
  %36 = vst.msk [vmem:[%s1 + $0x58] sm:$0xff] %vm24, %v19
  %37 = vst.msk [vmem:[%s1 + $0x60] sm:$0xff] %vm24, %v20
  %38 = vst.msk [vmem:[%s1 + $0x68] sm:$0xff] %vm24, %v21
  %39 = vst.msk [vmem:[%s1 + $0x70] sm:$0xff] %vm24, %v22
  %40 = vst.msk [vmem:[%s1 + $0x78] sm:$0xff] %vm24, %v23
  // Predicated region
  $region6: #{bravo_encoder_forward.1} parent=0 // pred_check
    _
  $region7: #{bravo_encoder_forward.1} parent=0 // pred_check_branch
    %42 = sbr.rel (0) target = $region9
  $region8: #{bravo_encoder_forward.1} parent=0 // pred_region
    _
  $region9: #{bravo_encoder_forward.1} parent=0 // pred_fallthru
    _
  // Predicated region
  $region10: #{bravo_encoder_forward.1} parent=0 // pred_check
    _
  $region11: #{bravo_encoder_forward.1} parent=0 // pred_check_branch
    %44 = sbr.rel (0) target = $region13
  $region12: #{bravo_encoder_forward.1} parent=0 // pred_region
    _
  $region13: #{bravo_encoder_forward.1} parent=0 // pred_fallthru
    _

</llo_original>
